<compile_context>
chip_gen: v7x
topology: tpu7x:2x2x1
jax: 0.10.0
libtpu: 0.0.40
codegen_flags: <defaults>
</compile_context>

<pallas_src>
import jax
import jax.numpy as jnp
from jax.experimental import pallas as pl
from jax.experimental.pallas import tpu as pltpu

EPSILON = 0.01  # matches `epsilon = 0.01` in the PyTorch source


# --------------------------------------------------------------------------
# Kernel 1: node-embedding -> W = kron(adj.T, I_t), emitted in matmul dtype.
# --------------------------------------------------------------------------
def _weight_kernel(emb_ref, w_ref):
    """W[row, col] = adj[col//t, row//t] * (row%t == col%t),
    adj = softmax(E @ E.T - 10*I, axis=-1).

    With this W, the per-node mixing over x's NATIVE (b,c,n,t) layout is one
    lane-dense matmul X(b*c, n*t) @ W — no HBM transposes anywhere.
    """
    e = emb_ref[...].astype(jnp.float32)                         # (n, d)
    n = e.shape[0]
    nt = w_ref.shape[0]
    t = nt // n

    # adj = softmax(E E^T - 10 I)
    logits = jax.lax.dot_general(
        e, e, (((1,), (1,)), ((), ())), preferred_element_type=jnp.float32)
    r = jax.lax.broadcasted_iota(jnp.int32, (n, n), 0)
    c = jax.lax.broadcasted_iota(jnp.int32, (n, n), 1)
    logits = logits - 10.0 * (r == c).astype(jnp.float32)
    m = jnp.max(logits, axis=-1, keepdims=True)
    p = jnp.exp(logits - m)
    adj = p / jnp.sum(p, axis=-1, keepdims=True)                 # (n, n)

    # Kronecker expansion without gathers or vector integer division:
    # //t and %t patterns are built in f32 (exact for realistic n*t), and the
    # (nt,nt) "gather" adj[col//t, row//t] is two small selector matmuls.
    t_f = float(t)
    row_node = jnp.floor(
        jax.lax.broadcasted_iota(jnp.int32, (nt, n), 0).astype(jnp.float32) / t_f)
    node_id = jax.lax.broadcasted_iota(jnp.int32, (nt, n), 1).astype(jnp.float32)
    sel = (row_node == node_id).astype(jnp.float32)              # (nt, n): row//t == i
    tmp = jax.lax.dot_general(                                    # tmp[row, j] = adj[j, row//t]
        sel, adj, (((1,), (1,)), ((), ())), preferred_element_type=jnp.float32)
    adj_big = jax.lax.dot_general(                                # adj[col//t, row//t]
        tmp, sel, (((1,), (1,)), ((), ())), preferred_element_type=jnp.float32)

    rr = jax.lax.broadcasted_iota(jnp.int32, (nt, nt), 0).astype(jnp.float32)
    cc = jax.lax.broadcasted_iota(jnp.int32, (nt, nt), 1).astype(jnp.float32)
    r_mod = rr - jnp.floor(rr / t_f) * t_f
    c_mod = cc - jnp.floor(cc / t_f) * t_f
    w_ref[...] = jnp.where(r_mod == c_mod, adj_big, 0.0).astype(w_ref.dtype)


# --------------------------------------------------------------------------
# Kernel 2: one (TG, n*t) row block: mean / E[x^2] matmuls + normalization.
# --------------------------------------------------------------------------
def _norm_kernel(w_ref, x_ref, out_ref, mean_ref, std_ref):
    x = x_ref[...]                                   # (TG, nt), lane-dense
    w = w_ref[...]                                   # (nt, nt), compute dtype
    x_f32 = x.astype(jnp.float32)

    # Two dots against the resident W (no sublane concat); bf16 operands by
    # default with f32 MXU accumulation.
    mean = jnp.dot(x.astype(w.dtype), w, preferred_element_type=jnp.float32)
    # Square in f32, quantize once to the matmul dtype (slightly better than
    # squaring an already-quantized x).
    ex2 = jnp.dot((x_f32 * x_f32).astype(w.dtype), w,
                  preferred_element_type=jnp.float32)

    var = ex2 - mean * mean + 1e-5
    # Cancellation guard: identical wherever var >= 0; avoids NaN in std where
    # the reference would NaN (near-constant rows).
    var = jnp.maximum(var, 0.0)

    inv = jax.lax.rsqrt(var + EPSILON)               # EUP rsqrt, no VALU divide
    out_ref[...] = ((x_f32 - mean) * inv).astype(out_ref.dtype)
    mean_ref[...] = mean.astype(mean_ref.dtype)
    std_ref[...] = jnp.sqrt(var).astype(std_ref.dtype)


# --------------------------------------------------------------------------
# Generation-aware sizing helpers.
# --------------------------------------------------------------------------
def _vmem_capacity_bytes():
    """Physical VMEM per TensorCore; conservative fallback if the query fails."""
    try:
        cap = getattr(pltpu.get_tpu_info(), "vmem_capacity_bytes", None)
        if cap:
            return int(cap)
    except Exception:
        pass
    return 64 * 1024 * 1024                          # v7x-class (smallest VMEM)


def _pick_block_rows(g, nt, x_bytes, stat_bytes, vmem_bytes):
    """Largest multiple-of-8 row block whose double-buffered (input + 3
    outputs) footprint fits a generation-aware budget; on v7x-class parts keep
    >= 4 grid steps (2 per TensorCore) when the batch allows, on v5e/v6e take
    the batch in one block when it fits (no pointless grid-step overhead)."""
    per_row = 2 * nt * (2 * x_bytes + 2 * stat_bytes)   # 2-deep in/out buffers
    v7x_class = vmem_bytes <= 72 * 1024 * 1024          # 64 MiB per TensorCore
    budget = (12 if v7x_class else 40) * 1024 * 1024    # v5e/v6e have 128 MiB
    min_steps = 4 if v7x_class else 1
    tg = (budget // max(per_row, 1)) // 8 * 8
    tg = max(8, min(tg, 2048))
    if min_steps > 1 and g >= 8 * min_steps:
        tg = min(tg, max(8, (g // min_steps) // 8 * 8))
    return g if g <= tg else tg


# --------------------------------------------------------------------------
# Wrapper.
# --------------------------------------------------------------------------
def ada_spatial_norm(x, node_embedding, *, compute_dtype=jnp.bfloat16,
                     low_precision_stats=False):
    """x: (b, c, n, t); node_embedding: (n, embedding_dim).

    Returns (out, mean, std), each (b, c, n, t), mirroring the PyTorch module.
    `compute_dtype` is the MXU matmul operand dtype (accumulation is always
    f32); `low_precision_stats=True` emits mean/std in bf16 to cut the
    writeback-dominated HBM traffic.
    """
    b, c, n, t = x.shape
    assert node_embedding.shape[0] == n
    nt = n * t
    g = b * c
    stat_dtype = jnp.bfloat16 if low_precision_stats else x.dtype

    # Kernel 1: W lands in HBM already in the matmul dtype (no adj round-trip,
    # no XLA kron op).
    w = pl.pallas_call(
        _weight_kernel,
        out_shape=jax.ShapeDtypeStruct((nt, nt), compute_dtype),
    )(node_embedding)

    # Free reshape — same memory order, no HBM transpose.  Pad rows to a
    # multiple of 8 so every block (incl. the single-block path) is 8-aligned.
    x2d = x.reshape(g, nt)
    g_pad = (g + 7) // 8 * 8
    if g_pad != g:
        x2d = jnp.pad(x2d, ((0, g_pad - g), (0, 0)))

    x_bytes = jnp.dtype(x.dtype).itemsize
    stat_bytes = jnp.dtype(stat_dtype).itemsize
    w_bytes = jnp.dtype(compute_dtype).itemsize
    vmem_bytes = _vmem_capacity_bytes()

    tg = _pick_block_rows(g_pad, nt, x_bytes, stat_bytes, vmem_bytes)
    grid = (pl.cdiv(g_pad, tg),)
    row_spec = pl.BlockSpec((tg, nt), lambda i: (i, 0))      # lane-dense I/O

    def _run(w_spec, w_buffers):
        block_io = 2 * tg * nt * (2 * x_bytes + 2 * stat_bytes)
        w_res = w_buffers * nt * nt * w_bytes
        temps = 8 * tg * nt * 4         # casts, x*x, f32 matmul results, var/inv
        vmem_limit = max(32 << 20, block_io + w_res + temps + (2 << 20))
        vmem_limit = int(min(vmem_limit, vmem_bytes - (8 << 20)))
        return pl.pallas_call(
            _norm_kernel,
            out_shape=(
                jax.ShapeDtypeStruct((g_pad, nt), x.dtype),      # out
                jax.ShapeDtypeStruct((g_pad, nt), stat_dtype),   # mean
                jax.ShapeDtypeStruct((g_pad, nt), stat_dtype),   # std
            ),
            grid=grid,
            in_specs=[w_spec, row_spec],
            out_specs=(row_spec, row_spec, row_spec),
            compiler_params=pltpu.CompilerParams(
                dimension_semantics=("parallel",),
                vmem_limit_bytes=vmem_limit,
            ),
        )(w, x2d)

    # W's index_map is constant -> single-buffered residency is enough.
    # Fall back to the default (double-buffered) spec on builds that reject it.
    try:
        w_spec = pl.BlockSpec((nt, nt), lambda i: (0, 0),
                              pipeline_mode=pl.Buffered(1))
        out2d, mean2d, std2d = _run(w_spec, 1)
    except Exception:
        out2d, mean2d, std2d = _run(pl.BlockSpec((nt, nt), lambda i: (0, 0)), 2)

    if g_pad != g:
        out2d, mean2d, std2d = out2d[:g], mean2d[:g], std2d[:g]
    shape = (b, c, n, t)
    return out2d.reshape(shape), mean2d.reshape(shape), std2d.reshape(shape)


# --------------------------------------------------------------------------
# Pure-JAX reference mirroring the PyTorch forward exactly.
# --------------------------------------------------------------------------
def _reference(x, node_embedding):
    b, c, n, t = x.shape
    adj = node_embedding @ node_embedding.T - 10.0 * jnp.eye(n)
    adj = jax.nn.softmax(adj, axis=-1)[None]                     # (1, n, n)
    x_f = jnp.transpose(x, (0, 3, 2, 1)).reshape(b * t, n, c)
    mean_f = jnp.matmul(adj, x_f)
    var_f = jnp.matmul(adj, x_f ** 2) - mean_f ** 2 + 1e-5
    mean = jnp.transpose(mean_f.reshape(b, t, n, c), (0, 3, 2, 1))
    var = jnp.transpose(var_f.reshape(b, t, n, c), (0, 3, 2, 1))
    out = (x - mean) / jnp.sqrt(var + EPSILON)
    return out, mean, jnp.sqrt(var)


if __name__ == "__main__":
    b, c, n, t = 2, 4, 16, 8
    embedding_dim = 8

    key = jax.random.PRNGKey(0)
    k1, k2 = jax.random.split(key)
    x = jax.random.normal(k1, (b, c, n, t), dtype=jnp.float32)
    # Module __init__ uses zeros; use a small deterministic embedding so the
    # adjacency is non-degenerate.
    node_embedding = 0.1 * jax.random.normal(
        k2, (n, embedding_dim), dtype=jnp.float32
    )

    ref_out, ref_mean, ref_std = _reference(x, node_embedding)

    # Default (perf) path: bf16 MXU operands, f32 accumulation.
    out, mean, std = ada_spatial_norm(x, node_embedding)
    jax.block_until_ready((out, mean, std))
    assert jnp.allclose(out, ref_out, atol=5e-2, rtol=5e-2)
    assert jnp.allclose(mean, ref_mean, atol=5e-2, rtol=5e-2)
    assert jnp.allclose(std, ref_std, atol=5e-2, rtol=5e-2)

    # Full-precision path: matches the reference tightly.
    out32, mean32, std32 = ada_spatial_norm(
        x, node_embedding, compute_dtype=jnp.float32)
    jax.block_until_ready((out32, mean32, std32))
    assert jnp.allclose(out32, ref_out, atol=1e-4, rtol=1e-4)
    assert jnp.allclose(mean32, ref_mean, atol=1e-4, rtol=1e-4)
    assert jnp.allclose(std32, ref_std, atol=1e-4, rtol=1e-4)

    print("KERNEL_OK")
</pallas_src>

<mosaic_0001>
module attributes {stable_mosaic.version = 11 : i64} {
  func.func @_weight_kernel(%arg0: memref<16x8xf32, #tpu.memory_space<vmem>>, %arg1: memref<128x128xbf16, #tpu.memory_space<vmem>>) attributes {dimension_semantics = [], scalar_prefetch = 0 : i64, scratch_operands = 0 : i64, tpu.core_type = #tpu.core_type<tc>} {
    %c0 = arith.constant 0 : index
    %c0_0 = arith.constant 0 : index
    %0 = vector.load %arg0[%c0, %c0_0] : memref<16x8xf32, #tpu.memory_space<vmem>>, vector<16x8xf32>
    %cst = arith.constant dense<0.000000e+00> : vector<16x16xf32>
    %1 = tpu.matmul %0, %0, %cst {dimension_numbers = #tpu.dot_dimension_numbers<[1], [1], [0], [0], [0, 0, 1, 0], [], []>} : vector<16x8xf32>, vector<16x8xf32>, vector<16x16xf32> -> vector<16x16xf32>
    %2 = tpu.iota {dimensions = array<i32: 0>} : vector<16x16xi32>
    %3 = tpu.iota {dimensions = array<i32: 1>} : vector<16x16xi32>
    %4 = arith.cmpi eq, %2, %3 : vector<16x16xi32>
    %5 = arith.extui %4 : vector<16x16xi1> to vector<16x16xi32>
    %6 = arith.sitofp %5 : vector<16x16xi32> to vector<16x16xf32>
    %cst_1 = arith.constant 1.000000e+01 : f32
    %7 = vector.broadcast %cst_1 : f32 to vector<16x16xf32>
    %8 = arith.mulf %7, %6 : vector<16x16xf32>
    %9 = arith.subf %1, %8 : vector<16x16xf32>
    %cst_2 = arith.constant dense<0xFF800000> : vector<16xf32>
    %10 = vector.multi_reduction <maximumf>, %9, %cst_2 [1] : vector<16x16xf32> to vector<16xf32>
    %11 = vector.shape_cast %10 : vector<16xf32> to vector<16x1xf32>
    %12 = vector.broadcast %11 : vector<16x1xf32> to vector<16x16xf32>
    %13 = arith.subf %9, %12 : vector<16x16xf32>
    %14 = math.exp %13 : vector<16x16xf32>
    %cst_3 = arith.constant dense<0.000000e+00> : vector<16xf32>
    %15 = vector.multi_reduction <add>, %14, %cst_3 [1] : vector<16x16xf32> to vector<16xf32>
    %16 = vector.shape_cast %15 : vector<16xf32> to vector<16x1xf32>
    %17 = vector.broadcast %16 : vector<16x1xf32> to vector<16x16xf32>
    %18 = arith.divf %14, %17 : vector<16x16xf32>
    %19 = tpu.iota {dimensions = array<i32: 0>} : vector<128x16xi32>
    %20 = arith.sitofp %19 : vector<128x16xi32> to vector<128x16xf32>
    %cst_4 = arith.constant 8.000000e+00 : f32
    %21 = vector.broadcast %cst_4 : f32 to vector<128x16xf32>
    %22 = arith.divf %20, %21 : vector<128x16xf32>
    %23 = math.floor %22 : vector<128x16xf32>
    %24 = tpu.iota {dimensions = array<i32: 1>} : vector<128x16xi32>
    %25 = arith.sitofp %24 : vector<128x16xi32> to vector<128x16xf32>
    %26 = arith.cmpf oeq, %23, %25 : vector<128x16xf32>
    %27 = arith.extui %26 : vector<128x16xi1> to vector<128x16xi32>
    %28 = arith.sitofp %27 : vector<128x16xi32> to vector<128x16xf32>
    %cst_5 = arith.constant dense<0.000000e+00> : vector<128x16xf32>
    %29 = tpu.matmul %28, %18, %cst_5 {dimension_numbers = #tpu.dot_dimension_numbers<[1], [1], [0], [0], [0, 0, 1, 0], [], []>} : vector<128x16xf32>, vector<16x16xf32>, vector<128x16xf32> -> vector<128x16xf32>
    %cst_6 = arith.constant dense<0.000000e+00> : vector<128x128xf32>
    %30 = tpu.matmul %29, %28, %cst_6 {dimension_numbers = #tpu.dot_dimension_numbers<[1], [1], [0], [0], [0, 0, 1, 0], [], []>} : vector<128x16xf32>, vector<128x16xf32>, vector<128x128xf32> -> vector<128x128xf32>
    %31 = tpu.iota {dimensions = array<i32: 0>} : vector<128x128xi32>
    %32 = arith.sitofp %31 : vector<128x128xi32> to vector<128x128xf32>
    %33 = tpu.iota {dimensions = array<i32: 1>} : vector<128x128xi32>
    %34 = arith.sitofp %33 : vector<128x128xi32> to vector<128x128xf32>
    %cst_7 = arith.constant 8.000000e+00 : f32
    %35 = vector.broadcast %cst_7 : f32 to vector<128x128xf32>
    %36 = arith.divf %32, %35 : vector<128x128xf32>
    %37 = math.floor %36 : vector<128x128xf32>
    %cst_8 = arith.constant 8.000000e+00 : f32
    %38 = vector.broadcast %cst_8 : f32 to vector<128x128xf32>
    %39 = arith.mulf %37, %38 : vector<128x128xf32>
    %40 = arith.subf %32, %39 : vector<128x128xf32>
    %cst_9 = arith.constant 8.000000e+00 : f32
    %41 = vector.broadcast %cst_9 : f32 to vector<128x128xf32>
    %42 = arith.divf %34, %41 : vector<128x128xf32>
    %43 = math.floor %42 : vector<128x128xf32>
    %cst_10 = arith.constant 8.000000e+00 : f32
    %44 = vector.broadcast %cst_10 : f32 to vector<128x128xf32>
    %45 = arith.mulf %43, %44 : vector<128x128xf32>
    %46 = arith.subf %34, %45 : vector<128x128xf32>
    %47 = arith.cmpf oeq, %40, %46 : vector<128x128xf32>
    %cst_11 = arith.constant 0.000000e+00 : f32
    %48 = vector.broadcast %cst_11 : f32 to vector<128x128xf32>
    %49 = arith.select %47, %30, %48 : vector<128x128xi1>, vector<128x128xf32>
    %50 = arith.truncf %49 : vector<128x128xf32> to vector<128x128xbf16>
    %c0_12 = arith.constant 0 : index
    %c0_13 = arith.constant 0 : index
    %51 = vector.load %arg1[%c0_12, %c0_13] : memref<128x128xbf16, #tpu.memory_space<vmem>>, vector<128x128xbf16>
    tpu.vector_store %arg1[%c0_12, %c0_13], %50 {strides = array<i32>} : memref<128x128xbf16, #tpu.memory_space<vmem>>, vector<128x128xbf16>,
    return
  }
}

</mosaic_0001>

<llo_original>
// kernel: tpu_custom_call.1
$region0: #{tpu_custom_call.1}
  #allocation0 [shape = 'u32[]', space=smem, size = 0x4, offset = 0x4, fixed_abs, tag = 'smem constant byte address 0x4 - core index']
  #allocation1 [shape = 'u32[144,128]{1,0:T(1,128)}', space=vmem, size = 0x12000, scoped, tag = 'internal scratch']
  %s0 = inlined_call_operand.vmem [shape: f32[16,8], index: 0, kind: input, shape index: {}]
  %s1 = inlined_call_operand.hbm [shape: bf16[128,128], index: 1, kind: output, shape index: {}]
  %s2 = sld [smem:[#allocation0]]
  $region14: #{tpu_custom_call.1} parent=0
    _
  %s4 = ssub.s32 1, %s2
  %s5 = scalar_select 0, %s4, %s2
  $region1: #{tpu_custom_call.1} parent=0
    #allocation2 [shape = 'u8[32768]{0}', space=vmem, size = 0x8000, scoped, tag = 'output window, operand 0, single buffered']
    #allocation3 [shape = 's32[1]{0}', space=sflag, size = 0x4, scoped, tag = 'scoped memory for tpu_custom_call.1']
    %6 = vsyncpa [#allocation3], 0
    // Predicated region
    $region2: #{tpu_custom_call.1} parent=1 // pred_check
      _
    $region3: #{tpu_custom_call.1} parent=1 // pred_check_branch
      %8 = sbr.rel (0) target = $region5
    $region4: #{tpu_custom_call.1} parent=1 // pred_region
      _
    $region5: #{tpu_custom_call.1} parent=1 // pred_fallthru
      _
    %v9 = vld [vmem:[%s0] sm:$0xff]
    %v10 = vld [vmem:[%s0 + $0x8] sm:$0xff]
    %vm11 = vcmask 64512
    %v13 = vsel %vm11, %v9, 0
    %v16 = vsel %vm11, %v10, 0
    %18 = vmatprep.subr.mxu0 0.0
    %19 = vmatpush1.xpose.msra.mxu0 %v13
    %20 = vmatprep.subr.mxu0 0.0
    %21 = vmatpush1.xpose.msra.mxu0 %v16
    %22 = vmatprep.subr.mxu0 0.0
    %23 = vmatpush1.xpose.msra.mxu0 0.0
    %24 = vmatprep.subr.mxu0 0.0
    %25 = vmatpush1.xpose.msra.mxu0 0.0
    %26 = vmatprep.subr.mxu0 0.0
    %27 = vmatpush1.xpose.msra.mxu0 0.0
    %28 = vmatprep.subr.mxu0 0.0
    %29 = vmatpush1.xpose.msra.mxu0 0.0
    %30 = vmatprep.subr.mxu0 0.0
    %31 = vmatpush1.xpose.msra.mxu0 0.0
    %32 = vmatprep.subr.mxu0 0.0
    %33 = vmatpush1.xpose.msra.mxu0 0.0
    %34 = vmatprep.subr.mxu0 0.0
    %35 = vmatpush1.xpose.msra.mxu0 0.0
    %36 = vmatprep.subr.mxu0 0.0
    %37 = vmatpush1.xpose.msra.mxu0 0.0
    %38 = vmatprep.subr.mxu0 0.0
    %39 = vmatpush1.xpose.msra.mxu0 0.0
    %40 = vmatprep.subr.mxu0 0.0
    %41 = vmatpush1.xpose.msra.mxu0 0.0
    %42 = vmatprep.subr.mxu0 0.0
    %43 = vmatpush1.xpose.msra.mxu0 0.0
    %44 = vmatprep.subr.mxu0 0.0
    %45 = vmatpush1.xpose.msra.mxu0 0.0
    %46 = vmatprep.subr.mxu0 0.0
    %47 = vmatpush1.xpose.msra.mxu0 0.0
    %48 = vmatprep.subr.mxu0 0.0
    %49 = vmatpush1.xpose.msra.mxu0 0.0
    %50 = vmatprep.subr.mxu0 0.0
    %51 = vmatpush1.xpose.msra.mxu0 0.0
    %52 = vmatprep.subr.mxu0 0.0
    %53 = vmatpush1.xpose.msra.mxu0 0.0
    %54 = vmatprep.subr.mxu0 0.0
    %55 = vmatpush1.xpose.msra.mxu0 0.0
    %56 = vmatprep.subr.mxu0 0.0
    %57 = vmatpush1.xpose.msra.mxu0 0.0
    %58 = vmatprep.subr.mxu0 0.0
    %59 = vmatpush1.xpose.msra.mxu0 0.0
    %60 = vmatprep.subr.mxu0 0.0
    %61 = vmatpush1.xpose.msra.mxu0 0.0
    %62 = vmatprep.subr.mxu0 0.0
    %63 = vmatpush1.xpose.msra.mxu0 0.0
    %64 = vmatprep.subr.mxu0 0.0
    %65 = vmatpush1.xpose.msra.mxu0 0.0
    %66 = vmatprep.subr.mxu0 0.0
    %67 = vmatpush1.xpose.msra.mxu0 0.0
    %68 = vmatprep.subr.mxu0 0.0
    %69 = vmatpush1.xpose.msra.mxu0 0.0
    %70 = vmatprep.subr.mxu0 0.0
    %71 = vmatpush1.xpose.msra.mxu0 0.0
    %72 = vmatprep.subr.mxu0 0.0
    %73 = vmatpush1.xpose.msra.mxu0 0.0
    %74 = vmatprep.subr.mxu0 0.0
    %75 = vmatpush1.xpose.msra.mxu0 0.0
    %76 = vmatprep.subr.mxu0 0.0
    %77 = vmatpush1.xpose.msra.mxu0 0.0
    %78 = vmatprep.subr.mxu0 0.0
    %79 = vmatpush1.xpose.msra.mxu0 0.0
    %80 = vmatprep.subr.mxu0 0.0
    %81 = vmatpush1.xpose.msra.mxu0 0.0
    %82 = vmatprep.mubr.f32.mxu0 0.0
    %83 = vmatmul.mubr.f32.gmra.mrb[0].mxu0 %v13
    %v84 = vpop.f32.mrb[0].mxu0
    %v85 = vadd.f32 0.0, %v84
    %v86 = vpop.f32.mrb[0].mxu0
    %87 = vmatprep.mubr.f32.mxu0 0.0
    %88 = vmatmul.mubr.f32.gmra.mrb[0].mxu0 %v16
    %v89 = vpop.f32.mrb[0].mxu0
    %v90 = vadd.f32 0.0, %v89
    %v91 = vpop.f32.mrb[0].mxu0
    %92 = vdwg.mxu0
    %v93 = vlaneseq
    %v94 = vshrl.u32 %v93, 7
    %v95 = vadd.s32 %v94, 8
    %v96 = vlaneseq
    %v97 = vand.u32 %v96, 127
    %vm98 = vcmp.eq.s32.totalorder %v94, %v97
    %vm99 = vcmp.eq.s32.totalorder %v95, %v97
    %v100 = vsel %vm98, 1, 0
    %v101 = vsel %vm99, 1, 0
    %v102 = vcvt.s32.f32 %v100
    %v103 = vcvt.s32.f32 %v101
    %v104 = vmul.f32 %v102, 10.0
    %v105 = vmul.f32 %v103, 10.0
    %v106 = vsub.f32 %v85, %v104
    %v107 = vsub.f32 %v90, %v105
    %vm108 = vcmask 130048
    %v109 = vsel %vm108, %v106, -inf
    %110 = vmax.xlane.f32.xlu0 %v109
    %v111 = vpop.xlane.xlu0 %110
    %v112 = vsel %vm108, %v107, -inf
    %113 = vmax.xlane.f32.xlu0 %v112
    %v114 = vpop.xlane.xlu0 %113
    %v115 = vsub.f32 %v106, %v111
    %v116 = vsub.f32 %v107, %v114
    %v117 = vmul.f32 %v115, 1.442695
    %v118 = vpow.pop %v117
    %v119 = vmul.f32 %v116, 1.442695
    %v120 = vpow.pop %v119
    %v121 = vsel %vm108, %v118, 0.0
    %122 = vadd.xlane.f32.xlu0 %v121
    %v123 = vpop.xlane.xlu0 %122
    %v124 = vsel %vm108, %v120, 0.0
    %125 = vadd.xlane.f32.xlu0 %v124
    %v126 = vpop.xlane.xlu0 %125
    %v127 = vrcp.pop %v123
    %v128 = vmul.f32 %v118, %v127
    %v129 = vrcp.pop %v126
    %v130 = vmul.f32 %v120, %v129
    %v131 = vadd.s32 %v94, 16
    %v132 = vadd.s32 %v94, 24
    %v133 = vadd.s32 %v94, 32
    %v134 = vadd.s32 %v94, 40
    %v135 = vadd.s32 %v94, 48
    %v136 = vadd.s32 %v94, 56
    %v137 = vadd.s32 %v94, 64
    %v138 = vadd.s32 %v94, 72
    %v139 = vadd.s32 %v94, 80
    %v140 = vadd.s32 %v94, 88
    %v141 = vadd.s32 %v94, 96
    %v142 = vadd.s32 %v94, 104
    %v143 = vadd.s32 %v94, 112
    %v144 = vadd.s32 %v94, 120
    %v145 = vcvt.s32.f32 %v94
    %v146 = vcvt.s32.f32 %v95
    %v147 = vcvt.s32.f32 %v131
    %v148 = vcvt.s32.f32 %v132
    %v149 = vcvt.s32.f32 %v133
    %v150 = vcvt.s32.f32 %v134
    %v151 = vcvt.s32.f32 %v135
    %v152 = vcvt.s32.f32 %v136
    %v153 = vcvt.s32.f32 %v137
    %v154 = vcvt.s32.f32 %v138
    %v155 = vcvt.s32.f32 %v139
    %v156 = vcvt.s32.f32 %v140
    %v157 = vcvt.s32.f32 %v141
    %v158 = vcvt.s32.f32 %v142
    %v159 = vcvt.s32.f32 %v143
    %v160 = vcvt.s32.f32 %v144
    %v161 = vrcp.pop 8.0
    %v162 = vmul.f32 %v145, %v161
    %v163 = vmul.f32 %v146, %v161
    %v164 = vmul.f32 %v147, %v161
    %v165 = vmul.f32 %v148, %v161
    %v166 = vmul.f32 %v149, %v161
    %v167 = vmul.f32 %v150, %v161
    %v168 = vmul.f32 %v151, %v161
    %v169 = vmul.f32 %v152, %v161
    %v170 = vmul.f32 %v153, %v161
    %v171 = vmul.f32 %v154, %v161
    %v172 = vmul.f32 %v155, %v161
    %v173 = vmul.f32 %v156, %v161
    %v174 = vmul.f32 %v157, %v161
    %v175 = vmul.f32 %v158, %v161
    %v176 = vmul.f32 %v159, %v161
    %v177 = vmul.f32 %v160, %v161
    %v178 = vfloor.f32 %v162
    %v179 = vfloor.f32 %v163
    %v180 = vfloor.f32 %v164
    %v181 = vfloor.f32 %v165
    %v182 = vfloor.f32 %v166
    %v183 = vfloor.f32 %v167
    %v184 = vfloor.f32 %v168
    %v185 = vfloor.f32 %v169
    %v186 = vfloor.f32 %v170
    %v187 = vfloor.f32 %v171
    %v188 = vfloor.f32 %v172
    %v189 = vfloor.f32 %v173
    %v190 = vfloor.f32 %v174
    %v191 = vfloor.f32 %v175
    %v192 = vfloor.f32 %v176
    %v193 = vfloor.f32 %v177
    %v194 = vcvt.s32.f32 %v97
    %vm195 = vcmp.eq.f32.partialorder %v178, %v194
    %vm196 = vcmp.eq.f32.partialorder %v179, %v194
    %vm197 = vcmp.eq.f32.partialorder %v180, %v194
    %vm198 = vcmp.eq.f32.partialorder %v181, %v194
    %vm199 = vcmp.eq.f32.partialorder %v182, %v194
    %vm200 = vcmp.eq.f32.partialorder %v183, %v194
    %vm201 = vcmp.eq.f32.partialorder %v184, %v194
    %vm202 = vcmp.eq.f32.partialorder %v185, %v194
    %vm203 = vcmp.eq.f32.partialorder %v186, %v194
    %vm204 = vcmp.eq.f32.partialorder %v187, %v194
    %vm205 = vcmp.eq.f32.partialorder %v188, %v194
    %vm206 = vcmp.eq.f32.partialorder %v189, %v194
    %vm207 = vcmp.eq.f32.partialorder %v190, %v194
    %vm208 = vcmp.eq.f32.partialorder %v191, %v194
    %vm209 = vcmp.eq.f32.partialorder %v192, %v194
    %vm210 = vcmp.eq.f32.partialorder %v193, %v194
    %v211 = vsel %vm195, 1, 0
    %v212 = vsel %vm196, 1, 0
    %v213 = vsel %vm197, 1, 0
    %v214 = vsel %vm198, 1, 0
    %v215 = vsel %vm199, 1, 0
    %v216 = vsel %vm200, 1, 0
    %v217 = vsel %vm201, 1, 0
    %v218 = vsel %vm202, 1, 0
    %v219 = vsel %vm203, 1, 0
    %v220 = vsel %vm204, 1, 0
    %v221 = vsel %vm205, 1, 0
    %v222 = vsel %vm206, 1, 0
    %v223 = vsel %vm207, 1, 0
    %v224 = vsel %vm208, 1, 0
    %v225 = vsel %vm209, 1, 0
    %v226 = vsel %vm210, 1, 0
    %v227 = vcvt.s32.f32 %v211
    %v228 = vcvt.s32.f32 %v212
    %v229 = vcvt.s32.f32 %v213
    %v230 = vcvt.s32.f32 %v214
    %v231 = vcvt.s32.f32 %v215
    %v232 = vcvt.s32.f32 %v216
    %v233 = vcvt.s32.f32 %v217
    %v234 = vcvt.s32.f32 %v218
    %v235 = vcvt.s32.f32 %v219
    %v236 = vcvt.s32.f32 %v220
    %v237 = vcvt.s32.f32 %v221
    %v238 = vcvt.s32.f32 %v222
    %v239 = vcvt.s32.f32 %v223
    %v240 = vcvt.s32.f32 %v224
    %v241 = vcvt.s32.f32 %v225
    %v242 = vcvt.s32.f32 %v226
    %v244 = vsel %vm108, %v227, 0
    %v247 = vsel %vm108, %v228, 0
    %v250 = vsel %vm108, %v229, 0
    %v253 = vsel %vm108, %v230, 0
    %v256 = vsel %vm108, %v231, 0
    %v259 = vsel %vm108, %v232, 0
    %v262 = vsel %vm108, %v233, 0
    %v265 = vsel %vm108, %v234, 0
    %v268 = vsel %vm108, %v235, 0
    %v271 = vsel %vm108, %v236, 0
    %v274 = vsel %vm108, %v237, 0
    %v277 = vsel %vm108, %v238, 0
    %v280 = vsel %vm108, %v239, 0
    %v283 = vsel %vm108, %v240, 0
    %v286 = vsel %vm108, %v241, 0
    %v289 = vsel %vm108, %v242, 0
    %v292 = vsel %vm108, %v128, 0
    %v295 = vsel %vm108, %v130, 0
    %297 = vmatprep.subr.mxu0 0.0
    %298 = vmatpush1.xpose.msra.mxu0 %v292
    %299 = vmatprep.subr.mxu0 0.0
    %300 = vmatpush1.xpose.msra.mxu0 %v295
    %301 = vmatprep.subr.mxu0 0.0
    %302 = vmatpush1.xpose.msra.mxu0 0.0
    %303 = vmatprep.subr.mxu0 0.0
    %304 = vmatpush1.xpose.msra.mxu0 0.0
    %305 = vmatprep.subr.mxu0 0.0
    %306 = vmatpush1.xpose.msra.mxu0 0.0
    %307 = vmatprep.subr.mxu0 0.0
    %308 = vmatpush1.xpose.msra.mxu0 0.0
    %309 = vmatprep.subr.mxu0 0.0
    %310 = vmatpush1.xpose.msra.mxu0 0.0
    %311 = vmatprep.subr.mxu0 0.0
    %312 = vmatpush1.xpose.msra.mxu0 0.0
    %313 = vmatprep.subr.mxu0 0.0
    %314 = vmatpush1.xpose.msra.mxu0 0.0
    %315 = vmatprep.subr.mxu0 0.0
    %316 = vmatpush1.xpose.msra.mxu0 0.0
    %317 = vmatprep.subr.mxu0 0.0
    %318 = vmatpush1.xpose.msra.mxu0 0.0
    %319 = vmatprep.subr.mxu0 0.0
    %320 = vmatpush1.xpose.msra.mxu0 0.0
    %321 = vmatprep.subr.mxu0 0.0
    %322 = vmatpush1.xpose.msra.mxu0 0.0
    %323 = vmatprep.subr.mxu0 0.0
    %324 = vmatpush1.xpose.msra.mxu0 0.0
    %325 = vmatprep.subr.mxu0 0.0
    %326 = vmatpush1.xpose.msra.mxu0 0.0
    %327 = vmatprep.subr.mxu0 0.0
    %328 = vmatpush1.xpose.msra.mxu0 0.0
    %329 = vmatprep.subr.mxu0 0.0
    %330 = vmatpush1.xpose.msra.mxu0 0.0
    %331 = vmatprep.subr.mxu0 0.0
    %332 = vmatpush1.xpose.msra.mxu0 0.0
    %333 = vmatprep.subr.mxu0 0.0
    %334 = vmatpush1.xpose.msra.mxu0 0.0
    %335 = vmatprep.subr.mxu0 0.0
    %336 = vmatpush1.xpose.msra.mxu0 0.0
    %337 = vmatprep.subr.mxu0 0.0
    %338 = vmatpush1.xpose.msra.mxu0 0.0
    %339 = vmatprep.subr.mxu0 0.0
    %340 = vmatpush1.xpose.msra.mxu0 0.0
    %341 = vmatprep.subr.mxu0 0.0
    %342 = vmatpush1.xpose.msra.mxu0 0.0
    %343 = vmatprep.subr.mxu0 0.0
    %344 = vmatpush1.xpose.msra.mxu0 0.0
    %345 = vmatprep.subr.mxu0 0.0
    %346 = vmatpush1.xpose.msra.mxu0 0.0
    %347 = vmatprep.subr.mxu0 0.0
    %348 = vmatpush1.xpose.msra.mxu0 0.0
    %349 = vmatprep.subr.mxu0 0.0
    %350 = vmatpush1.xpose.msra.mxu0 0.0
    %351 = vmatprep.subr.mxu0 0.0
    %352 = vmatpush1.xpose.msra.mxu0 0.0
    %353 = vmatprep.subr.mxu0 0.0
    %354 = vmatpush1.xpose.msra.mxu0 0.0
    %355 = vmatprep.subr.mxu0 0.0
    %356 = vmatpush1.xpose.msra.mxu0 0.0
    %357 = vmatprep.subr.mxu0 0.0
    %358 = vmatpush1.xpose.msra.mxu0 0.0
    %359 = vmatprep.subr.mxu0 0.0
    %360 = vmatpush1.xpose.msra.mxu0 0.0
    %361 = vmatprep.mubr.f32.mxu0 0.0
    %362 = vmatmul.mubr.f32.gmra.mrb[0].mxu0 %v244
    %v363 = vpop.f32.mrb[0].mxu0
    %v364 = vadd.f32 0.0, %v363
    %v365 = vpop.f32.mrb[0].mxu0
    %366 = vmatprep.mubr.f32.mxu0 0.0
    %367 = vmatmul.mubr.f32.gmra.mrb[0].mxu0 %v247
    %v368 = vpop.f32.mrb[0].mxu0
    %v369 = vadd.f32 0.0, %v368
    %v370 = vpop.f32.mrb[0].mxu0
    %371 = vmatprep.mubr.f32.mxu0 0.0
    %372 = vmatmul.mubr.f32.gmra.mrb[0].mxu0 %v250
    %v373 = vpop.f32.mrb[0].mxu0
    %v374 = vadd.f32 0.0, %v373
    %v375 = vpop.f32.mrb[0].mxu0
    %376 = vmatprep.mubr.f32.mxu0 0.0
    %377 = vmatmul.mubr.f32.gmra.mrb[0].mxu0 %v253
    %v378 = vpop.f32.mrb[0].mxu0
    %v379 = vadd.f32 0.0, %v378
    %v380 = vpop.f32.mrb[0].mxu0
    %381 = vmatprep.mubr.f32.mxu0 0.0
    %382 = vmatmul.mubr.f32.gmra.mrb[0].mxu0 %v256
    %v383 = vpop.f32.mrb[0].mxu0
    %v384 = vadd.f32 0.0, %v383
    %v385 = vpop.f32.mrb[0].mxu0
    %386 = vmatprep.mubr.f32.mxu0 0.0
    %387 = vmatmul.mubr.f32.gmra.mrb[0].mxu0 %v259
    %v388 = vpop.f32.mrb[0].mxu0
    %v389 = vadd.f32 0.0, %v388
    %v390 = vpop.f32.mrb[0].mxu0
    %391 = vmatprep.mubr.f32.mxu0 0.0
    %392 = vmatmul.mubr.f32.gmra.mrb[0].mxu0 %v262
    %v393 = vpop.f32.mrb[0].mxu0
    %v394 = vadd.f32 0.0, %v393
    %v395 = vpop.f32.mrb[0].mxu0
    %396 = vmatprep.mubr.f32.mxu0 0.0
    %397 = vmatmul.mubr.f32.gmra.mrb[0].mxu0 %v265
    %v398 = vpop.f32.mrb[0].mxu0
    %v399 = vadd.f32 0.0, %v398
    %v400 = vpop.f32.mrb[0].mxu0
    %401 = vmatprep.mubr.f32.mxu0 0.0
    %402 = vmatmul.mubr.f32.gmra.mrb[0].mxu0 %v268
    %v403 = vpop.f32.mrb[0].mxu0
    %v404 = vadd.f32 0.0, %v403
    %v405 = vpop.f32.mrb[0].mxu0
    %406 = vmatprep.mubr.f32.mxu0 0.0
    %407 = vmatmul.mubr.f32.gmra.mrb[0].mxu0 %v271
    %v408 = vpop.f32.mrb[0].mxu0
    %v409 = vadd.f32 0.0, %v408
    %v410 = vpop.f32.mrb[0].mxu0
    %411 = vmatprep.mubr.f32.mxu0 0.0
    %412 = vmatmul.mubr.f32.gmra.mrb[0].mxu0 %v274
    %v413 = vpop.f32.mrb[0].mxu0
    %v414 = vadd.f32 0.0, %v413
    %v415 = vpop.f32.mrb[0].mxu0
    %416 = vmatprep.mubr.f32.mxu0 0.0
    %417 = vmatmul.mubr.f32.gmra.mrb[0].mxu0 %v277
    %v418 = vpop.f32.mrb[0].mxu0
    %v419 = vadd.f32 0.0, %v418
    %v420 = vpop.f32.mrb[0].mxu0
    %421 = vmatprep.mubr.f32.mxu0 0.0
    %422 = vmatmul.mubr.f32.gmra.mrb[0].mxu0 %v280
    %v423 = vpop.f32.mrb[0].mxu0
    %v424 = vadd.f32 0.0, %v423
    %v425 = vpop.f32.mrb[0].mxu0
    %426 = vmatprep.mubr.f32.mxu0 0.0
    %427 = vmatmul.mubr.f32.gmra.mrb[0].mxu0 %v283
    %v428 = vpop.f32.mrb[0].mxu0
    %v429 = vadd.f32 0.0, %v428
    %v430 = vpop.f32.mrb[0].mxu0
    %431 = vmatprep.mubr.f32.mxu0 0.0
    %432 = vmatmul.mubr.f32.gmra.mrb[0].mxu0 %v286
    %v433 = vpop.f32.mrb[0].mxu0
    %v434 = vadd.f32 0.0, %v433
    %v435 = vpop.f32.mrb[0].mxu0
    %436 = vmatprep.mubr.f32.mxu0 0.0
    %437 = vmatmul.mubr.f32.gmra.mrb[0].mxu0 %v289
    %v438 = vpop.f32.mrb[0].mxu0
    %v439 = vadd.f32 0.0, %v438
    %v440 = vpop.f32.mrb[0].mxu0
    %441 = vdwg.mxu0
    %v443 = vsel %vm108, %v364, 0
    %v446 = vsel %vm108, %v369, 0
    %v449 = vsel %vm108, %v374, 0
    %v452 = vsel %vm108, %v379, 0
    %v455 = vsel %vm108, %v384, 0
    %v458 = vsel %vm108, %v389, 0
    %v461 = vsel %vm108, %v394, 0
    %v464 = vsel %vm108, %v399, 0
    %v467 = vsel %vm108, %v404, 0
    %v470 = vsel %vm108, %v409, 0
    %v473 = vsel %vm108, %v414, 0
    %v476 = vsel %vm108, %v419, 0
    %v479 = vsel %vm108, %v424, 0
    %v482 = vsel %vm108, %v429, 0
    %v485 = vsel %vm108, %v434, 0
    %v488 = vsel %vm108, %v439, 0
    %490 = vmatprep.subr.mxu0 0.0
    %491 = vmatpush1.xpose.msra.mxu0 %v244
    %492 = vmatprep.subr.mxu0 0.0
    %493 = vmatpush1.xpose.msra.mxu0 %v247
    %494 = vmatprep.subr.mxu0 0.0
    %495 = vmatpush1.xpose.msra.mxu0 %v250
    %496 = vmatprep.subr.mxu0 0.0
    %497 = vmatpush1.xpose.msra.mxu0 %v253
    %498 = vmatprep.subr.mxu0 0.0
    %499 = vmatpush1.xpose.msra.mxu0 %v256
    %500 = vmatprep.subr.mxu0 0.0
    %501 = vmatpush1.xpose.msra.mxu0 %v259
    %502 = vmatprep.subr.mxu0 0.0
    %503 = vmatpush1.xpose.msra.mxu0 %v262
    %504 = vmatprep.subr.mxu0 0.0
    %505 = vmatpush1.xpose.msra.mxu0 %v265
    %506 = vmatprep.subr.mxu0 0.0
    %507 = vmatpush1.xpose.msra.mxu0 %v268
    %508 = vmatprep.subr.mxu0 0.0
    %509 = vmatpush1.xpose.msra.mxu0 %v271
    %510 = vmatprep.subr.mxu0 0.0
    %511 = vmatpush1.xpose.msra.mxu0 %v274
    %512 = vmatprep.subr.mxu0 0.0
    %513 = vmatpush1.xpose.msra.mxu0 %v277
    %514 = vmatprep.subr.mxu0 0.0
    %515 = vmatpush1.xpose.msra.mxu0 %v280
    %516 = vmatprep.subr.mxu0 0.0
    %517 = vmatpush1.xpose.msra.mxu0 %v283
    %518 = vmatprep.subr.mxu0 0.0
    %519 = vmatpush1.xpose.msra.mxu0 %v286
    %520 = vmatprep.subr.mxu0 0.0
    %521 = vmatpush1.xpose.msra.mxu0 %v289
    %522 = vmatprep.subr.mxu0 0.0
    %523 = vmatpush1.xpose.msra.mxu0 0.0
    %524 = vmatprep.subr.mxu0 0.0
    %525 = vmatpush1.xpose.msra.mxu0 0.0
    %526 = vmatprep.subr.mxu0 0.0
    %527 = vmatpush1.xpose.msra.mxu0 0.0
    %528 = vmatprep.subr.mxu0 0.0
    %529 = vmatpush1.xpose.msra.mxu0 0.0
    %530 = vmatprep.subr.mxu0 0.0
    %531 = vmatpush1.xpose.msra.mxu0 0.0
    %532 = vmatprep.subr.mxu0 0.0
    %533 = vmatpush1.xpose.msra.mxu0 0.0
    %534 = vmatprep.subr.mxu0 0.0
    %535 = vmatpush1.xpose.msra.mxu0 0.0
    %536 = vmatprep.subr.mxu0 0.0
    %537 = vmatpush1.xpose.msra.mxu0 0.0
    %538 = vmatprep.subr.mxu0 0.0
    %539 = vmatpush1.xpose.msra.mxu0 0.0
    %540 = vmatprep.subr.mxu0 0.0
    %541 = vmatpush1.xpose.msra.mxu0 0.0
    %542 = vmatprep.subr.mxu0 0.0
    %543 = vmatpush1.xpose.msra.mxu0 0.0
    %544 = vmatprep.subr.mxu0 0.0
    %545 = vmatpush1.xpose.msra.mxu0 0.0
    %546 = vmatprep.subr.mxu0 0.0
    %547 = vmatpush1.xpose.msra.mxu0 0.0
    %548 = vmatprep.subr.mxu0 0.0
    %549 = vmatpush1.xpose.msra.mxu0 0.0
    %550 = vmatprep.subr.mxu0 0.0
    %551 = vmatpush1.xpose.msra.mxu0 0.0
    %552 = vmatprep.subr.mxu0 0.0
    %553 = vmatpush1.xpose.msra.mxu0 0.0
    %554 = vmatprep.mubr.f32.mxu0 0.0
    %555 = vmatmul.mubr.f32.gmra.mrb[0].mxu0 %v443
    %v556 = vpop.f32.mrb[0].mxu0
    %v557 = vadd.f32 0.0, %v556
    %v558 = vpop.f32.mrb[0].mxu0
    %559 = vmatprep.mubr.f32.mxu0 0.0
    %560 = vmatmul.mubr.f32.gmra.mrb[0].mxu0 %v446
    %v561 = vpop.f32.mrb[0].mxu0
    %v562 = vadd.f32 0.0, %v561
    %v563 = vpop.f32.mrb[0].mxu0
    %564 = vmatprep.mubr.f32.mxu0 0.0
    %565 = vmatmul.mubr.f32.gmra.mrb[0].mxu0 %v449
    %v566 = vpop.f32.mrb[0].mxu0
    %v567 = vadd.f32 0.0, %v566
    %v568 = vpop.f32.mrb[0].mxu0
    %569 = vmatprep.mubr.f32.mxu0 0.0
    %570 = vmatmul.mubr.f32.gmra.mrb[0].mxu0 %v452
    %v571 = vpop.f32.mrb[0].mxu0
    %v572 = vadd.f32 0.0, %v571
    %v573 = vpop.f32.mrb[0].mxu0
    %574 = vmatprep.mubr.f32.mxu0 0.0
    %575 = vmatmul.mubr.f32.gmra.mrb[0].mxu0 %v455
    %v576 = vpop.f32.mrb[0].mxu0
    %v577 = vadd.f32 0.0, %v576
    %v578 = vpop.f32.mrb[0].mxu0
    %579 = vmatprep.mubr.f32.mxu0 0.0
    %580 = vmatmul.mubr.f32.gmra.mrb[0].mxu0 %v458
    %v581 = vpop.f32.mrb[0].mxu0
    %v582 = vadd.f32 0.0, %v581
    %v583 = vpop.f32.mrb[0].mxu0
    %584 = vmatprep.mubr.f32.mxu0 0.0
    %585 = vmatmul.mubr.f32.gmra.mrb[0].mxu0 %v461
    %v586 = vpop.f32.mrb[0].mxu0
    %v587 = vadd.f32 0.0, %v586
    %v588 = vpop.f32.mrb[0].mxu0
    %589 = vmatprep.mubr.f32.mxu0 0.0
    %590 = vmatmul.mubr.f32.gmra.mrb[0].mxu0 %v464
    %v591 = vpop.f32.mrb[0].mxu0
    %v592 = vadd.f32 0.0, %v591
    %v593 = vpop.f32.mrb[0].mxu0
    %594 = vmatprep.mubr.f32.mxu0 0.0
    %595 = vmatmul.mubr.f32.gmra.mrb[0].mxu0 %v467
    %v596 = vpop.f32.mrb[0].mxu0
    %v597 = vadd.f32 0.0, %v596
    %v598 = vpop.f32.mrb[0].mxu0
    %599 = vmatprep.mubr.f32.mxu0 0.0
    %600 = vmatmul.mubr.f32.gmra.mrb[0].mxu0 %v470
    %v601 = vpop.f32.mrb[0].mxu0
    %v602 = vadd.f32 0.0, %v601
    %v603 = vpop.f32.mrb[0].mxu0
    %604 = vmatprep.mubr.f32.mxu0 0.0
    %605 = vmatmul.mubr.f32.gmra.mrb[0].mxu0 %v473
    %v606 = vpop.f32.mrb[0].mxu0
    %v607 = vadd.f32 0.0, %v606
    %v608 = vpop.f32.mrb[0].mxu0
    %609 = vmatprep.mubr.f32.mxu0 0.0
    %610 = vmatmul.mubr.f32.gmra.mrb[0].mxu0 %v476
    %v611 = vpop.f32.mrb[0].mxu0
    %v612 = vadd.f32 0.0, %v611
    %v613 = vpop.f32.mrb[0].mxu0
    %614 = vmatprep.mubr.f32.mxu0 0.0
    %615 = vmatmul.mubr.f32.gmra.mrb[0].mxu0 %v479
    %v616 = vpop.f32.mrb[0].mxu0
    %v617 = vadd.f32 0.0, %v616
    %v618 = vpop.f32.mrb[0].mxu0
    %619 = vmatprep.mubr.f32.mxu0 0.0
    %620 = vmatmul.mubr.f32.gmra.mrb[0].mxu0 %v482
    %v621 = vpop.f32.mrb[0].mxu0
    %v622 = vadd.f32 0.0, %v621
    %v623 = vpop.f32.mrb[0].mxu0
    %624 = vmatprep.mubr.f32.mxu0 0.0
    %625 = vmatmul.mubr.f32.gmra.mrb[0].mxu0 %v485
    %v626 = vpop.f32.mrb[0].mxu0
    %v627 = vadd.f32 0.0, %v626
    %v628 = vpop.f32.mrb[0].mxu0
    %629 = vmatprep.mubr.f32.mxu0 0.0
    %630 = vmatmul.mubr.f32.gmra.mrb[0].mxu0 %v488
    %v631 = vpop.f32.mrb[0].mxu0
    %v632 = vadd.f32 0.0, %v631
    %v633 = vpop.f32.mrb[0].mxu0
    %634 = vdwg.mxu0
    %v635 = vmul.f32 %v178, 8.0
    %v636 = vmul.f32 %v179, 8.0
    %v637 = vmul.f32 %v180, 8.0
    %v638 = vmul.f32 %v181, 8.0
    %v639 = vmul.f32 %v182, 8.0
    %v640 = vmul.f32 %v183, 8.0
    %v641 = vmul.f32 %v184, 8.0
    %v642 = vmul.f32 %v185, 8.0
    %v643 = vmul.f32 %v186, 8.0
    %v644 = vmul.f32 %v187, 8.0
    %v645 = vmul.f32 %v188, 8.0
    %v646 = vmul.f32 %v189, 8.0
    %v647 = vmul.f32 %v190, 8.0
    %v648 = vmul.f32 %v191, 8.0
    %v649 = vmul.f32 %v192, 8.0
    %v650 = vmul.f32 %v193, 8.0
    %v651 = vsub.f32 %v145, %v635
    %v652 = vsub.f32 %v146, %v636
    %v653 = vsub.f32 %v147, %v637
    %v654 = vsub.f32 %v148, %v638
    %v655 = vsub.f32 %v149, %v639
    %v656 = vsub.f32 %v150, %v640
    %v657 = vsub.f32 %v151, %v641
    %v658 = vsub.f32 %v152, %v642
    %v659 = vsub.f32 %v153, %v643
    %v660 = vsub.f32 %v154, %v644
    %v661 = vsub.f32 %v155, %v645
    %v662 = vsub.f32 %v156, %v646
    %v663 = vsub.f32 %v157, %v647
    %v664 = vsub.f32 %v158, %v648
    %v665 = vsub.f32 %v159, %v649
    %v666 = vsub.f32 %v160, %v650
    %v667 = vmul.f32 %v194, %v161
    %v668 = vfloor.f32 %v667
    %v669 = vmul.f32 %v668, 8.0
    %v670 = vsub.f32 %v194, %v669
    %vm671 = vcmp.eq.f32.partialorder %v651, %v670
    %vm672 = vcmp.eq.f32.partialorder %v652, %v670
    %vm673 = vcmp.eq.f32.partialorder %v653, %v670
    %vm674 = vcmp.eq.f32.partialorder %v654, %v670
    %vm675 = vcmp.eq.f32.partialorder %v655, %v670
    %vm676 = vcmp.eq.f32.partialorder %v656, %v670
    %vm677 = vcmp.eq.f32.partialorder %v657, %v670
    %vm678 = vcmp.eq.f32.partialorder %v658, %v670
    %vm679 = vcmp.eq.f32.partialorder %v659, %v670
    %vm680 = vcmp.eq.f32.partialorder %v660, %v670
    %vm681 = vcmp.eq.f32.partialorder %v661, %v670
    %vm682 = vcmp.eq.f32.partialorder %v662, %v670
    %vm683 = vcmp.eq.f32.partialorder %v663, %v670
    %vm684 = vcmp.eq.f32.partialorder %v664, %v670
    %vm685 = vcmp.eq.f32.partialorder %v665, %v670
    %vm686 = vcmp.eq.f32.partialorder %v666, %v670
    %v687 = vsel %vm671, %v557, 0.0
    %v688 = vsel %vm672, %v562, 0.0
    %v689 = vsel %vm673, %v567, 0.0
    %v690 = vsel %vm674, %v572, 0.0
    %v691 = vsel %vm675, %v577, 0.0
    %v692 = vsel %vm676, %v582, 0.0
    %v693 = vsel %vm677, %v587, 0.0
    %v694 = vsel %vm678, %v592, 0.0
    %v695 = vsel %vm679, %v597, 0.0
    %v696 = vsel %vm680, %v602, 0.0
    %v697 = vsel %vm681, %v607, 0.0
    %v698 = vsel %vm682, %v612, 0.0
    %v699 = vsel %vm683, %v617, 0.0
    %v700 = vsel %vm684, %v622, 0.0
    %v701 = vsel %vm685, %v627, 0.0
    %v702 = vsel %vm686, %v632, 0.0
    %v703 = vpack.c.bf16 %v688, %v687
    %v704 = vpack.c.bf16 %v690, %v689
    %v705 = vpack.c.bf16 %v692, %v691
    %v706 = vpack.c.bf16 %v694, %v693
    %v707 = vpack.c.bf16 %v696, %v695
    %v708 = vpack.c.bf16 %v698, %v697
    %v709 = vpack.c.bf16 %v700, %v699
    %v710 = vpack.c.bf16 %v702, %v701
    %v719 = vunpack.c.l.b16 %v703
    %v720 = vunpack.c.h.b16 %v703
    %v721 = vunpack.c.l.b16 %v704
    %v722 = vunpack.c.h.b16 %v704
    %v723 = vunpack.c.l.b16 %v705
    %v724 = vunpack.c.h.b16 %v705
    %v725 = vunpack.c.l.b16 %v706
    %v726 = vunpack.c.h.b16 %v706
    %v727 = vunpack.c.l.b16 %v707
    %v728 = vunpack.c.h.b16 %v707
    %v729 = vunpack.c.l.b16 %v708
    %v730 = vunpack.c.h.b16 %v708
    %v731 = vunpack.c.l.b16 %v709
    %v732 = vunpack.c.h.b16 %v709
    %v733 = vunpack.c.l.b16 %v710
    %v734 = vunpack.c.h.b16 %v710
    %v735 = vpack.c.b16 %v719, %v719
    %v736 = vpack.c.b16 %v720, %v720
    %v737 = vpack.c.b16 %v721, %v721
    %v738 = vpack.c.b16 %v722, %v722
    %v739 = vpack.c.b16 %v723, %v723
    %v740 = vpack.c.b16 %v724, %v724
    %v741 = vpack.c.b16 %v725, %v725
    %v742 = vpack.c.b16 %v726, %v726
    %v743 = vpack.c.b16 %v727, %v727
    %v744 = vpack.c.b16 %v728, %v728
    %v745 = vpack.c.b16 %v729, %v729
    %v746 = vpack.c.b16 %v730, %v730
    %v747 = vpack.c.b16 %v731, %v731
    %v748 = vpack.c.b16 %v732, %v732
    %v749 = vpack.c.b16 %v733, %v733
    %v750 = vpack.c.b16 %v734, %v734
    %767 = vst [vmem:[#allocation2] sm:$0xf] %v735
    %768 = vst [vmem:[#allocation2 + $0x4] sm:$0xf] %v736
    %769 = vst [vmem:[#allocation2 + $0x8] sm:$0xf] %v737
    %770 = vst [vmem:[#allocation2 + $0xc] sm:$0xf] %v738
    %771 = vst [vmem:[#allocation2 + $0x10] sm:$0xf] %v739
    %772 = vst [vmem:[#allocation2 + $0x14] sm:$0xf] %v740
    %773 = vst [vmem:[#allocation2 + $0x18] sm:$0xf] %v741
    %774 = vst [vmem:[#allocation2 + $0x1c] sm:$0xf] %v742
    %775 = vst [vmem:[#allocation2 + $0x20] sm:$0xf] %v743
    %776 = vst [vmem:[#allocation2 + $0x24] sm:$0xf] %v744
    %777 = vst [vmem:[#allocation2 + $0x28] sm:$0xf] %v745
    %778 = vst [vmem:[#allocation2 + $0x2c] sm:$0xf] %v746
    %779 = vst [vmem:[#allocation2 + $0x30] sm:$0xf] %v747
    %780 = vst [vmem:[#allocation2 + $0x34] sm:$0xf] %v748
    %781 = vst [vmem:[#allocation2 + $0x38] sm:$0xf] %v749
    %782 = vst [vmem:[#allocation2 + $0x3c] sm:$0xf] %v750
    // Predicated region
    $region6: #{tpu_custom_call.1} parent=1 // pred_check
      _
    $region7: #{tpu_custom_call.1} parent=1 // pred_check_branch
      %784 = sbr.rel (0) target = $region9
    $region8: #{tpu_custom_call.1} parent=1 // pred_region
      %s786 = ssub.s32 1024, 1024
      %787 = vsyncadd [#allocation3], %s786
      %s788 = sshll.u32 [#allocation2], 4
      %s789 = int_to_ptr.vmem [resolvable:$true] %s788
      %794 = dma.vmem_to_hbm [thread:$0]  %s789, 1024, %s1, [#allocation3], 64, 64, 4
    $region9: #{tpu_custom_call.1} parent=1 // pred_fallthru
      _
    // Predicated region
    $region10: #{tpu_custom_call.1} parent=1 // pred_check
      _
    $region11: #{tpu_custom_call.1} parent=1 // pred_check_branch
      %796 = sbr.rel (0) target = $region13
    $region12: #{tpu_custom_call.1} parent=1 // pred_region
      %797 = dma.done [#allocation3], 1024
    $region13: #{tpu_custom_call.1} parent=1 // pred_fallthru
      _
    %798 = vsyncpa [#allocation3], 1

</llo_original>
